<compile_context>
chip_gen: v7x
topology: tpu7x:2x2x1
jax: 0.10.0
libtpu: 0.0.40
codegen_flags: <defaults>
</compile_context>

<pallas_src>
import jax
import jax.numpy as jnp
from jax.experimental import pallas as pl
from jax.experimental.pallas import tpu as pltpu

# cfg values (deterministic, in-script): typical QFL hyperparameters.
QFL_LOSS_WEIGHT = 1.0
QFL_LOSS_BETA = 2.0

_LANES = 128
_SUBLANES = 8
_MAX_TILE_ROWS = 1024   # (1024, 128) f32 = 512 KiB per buffer
_NUM_SLICES = 2         # leading "parallel" axis: megacore split on v7x
_PAD_LOGIT = -1e4       # sigmoid(-1e4) == 0 and log1p(exp(-1e4)) == 0
                        # -> padded elements contribute exactly zero loss


def _round_up(a, b):
    return ((a + b - 1) // b) * b


def _make_qfl_kernel(beta):
    beta = float(beta)

    def kernel(p_ref, t_ref, o_ref):
        i = pl.program_id(1)

        x = p_ref[...].astype(jnp.float32)   # cast in-kernel (inputs may be bf16)
        t = t_ref[...].astype(jnp.float32)

        # Numerically stable BCE-with-logits, sharing exp(-|x|) with sigmoid.
        e = jnp.exp(-jnp.abs(x))                        # single EUP exp
        bce = jnp.maximum(x, 0.0) - x * t + jnp.log1p(e)
        sig = jnp.where(x >= 0.0, 1.0, e) / (1.0 + e)   # exact sigmoid from e
        d = sig - t
        if beta == 2.0:          # compile-time specialization (default cfg)
            scale = d * d
        elif beta == 1.0:
            scale = jnp.abs(d)
        else:
            scale = jnp.abs(d) ** beta
        loss = bce * scale

        # Elementwise accumulation into the resident output block across the
        # inner ("arbitrary") axis: pure full-vreg VPU adds, no per-step
        # cross-lane reduction and no sub-(8,128) scalar stores.
        @pl.when(i == 0)
        def _():
            o_ref[...] = loss

        @pl.when(i != 0)
        def _():
            o_ref[...] += loss

    return kernel


def qfl_loss(preds, targets, avg_factor=None,
             weight=QFL_LOSS_WEIGHT, beta=QFL_LOSS_BETA):
    """QFL loss forward (same semantics as PyTorch QFLLoss.forward)."""
    assert preds.shape == targets.shape
    n = int(preds.size)

    rows = _round_up(n, _LANES) // _LANES
    tile_rows = min(_MAX_TILE_ROWS,
                    _round_up(-(-rows // _NUM_SLICES), _SUBLANES))
    rows_padded = _round_up(rows, _NUM_SLICES * tile_rows)
    steps = rows_padded // (_NUM_SLICES * tile_rows)
    n_pad = rows_padded * _LANES

    # Keep the original dtype in HBM (cast happens in-kernel); only pad when
    # the element count does not already tile exactly (reshape alone is free).
    p_flat = preds.reshape(-1)
    t_flat = targets.reshape(-1)
    if n_pad != n:
        p_flat = jnp.pad(p_flat, (0, n_pad - n), constant_values=_PAD_LOGIT)
        t_flat = jnp.pad(t_flat, (0, n_pad - n))
    p2 = p_flat.reshape(rows_padded, _LANES)
    t2 = t_flat.reshape(rows_padded, _LANES)

    tile_spec = pl.BlockSpec((tile_rows, _LANES),
                             lambda c, i, s=steps: (c * s + i, 0))

    partial = pl.pallas_call(
        _make_qfl_kernel(beta),
        out_shape=jax.ShapeDtypeStruct((_NUM_SLICES * tile_rows, _LANES),
                                       jnp.float32),
        grid_spec=pltpu.PrefetchScalarGridSpec(
            num_scalar_prefetch=0,
            grid=(_NUM_SLICES, steps),
            in_specs=[tile_spec, tile_spec],
            out_specs=pl.BlockSpec((tile_rows, _LANES), lambda c, i: (c, 0)),
        ),
        compiler_params=pltpu.CompilerParams(
            dimension_semantics=("parallel", "arbitrary")),
    )(p2, t2)

    # Tiny final cross-lane reduction (<= NUM_SLICES*tile_rows*128 f32) in XLA.
    loss = jnp.sum(partial) * jnp.float32(weight)
    if avg_factor is not None:
        loss = loss / avg_factor
    return loss


def _qfl_loss_ref(preds, targets, avg_factor=None,
                  weight=QFL_LOSS_WEIGHT, beta=QFL_LOSS_BETA):
    x = preds.astype(jnp.float32)
    t = targets.astype(jnp.float32)
    bce = jnp.maximum(x, 0.0) - x * t + jnp.log1p(jnp.exp(-jnp.abs(x)))
    sig = jax.nn.sigmoid(x)
    loss = bce * (jnp.abs(sig - t) ** beta)
    out = jnp.sum(loss) * weight
    if avg_factor is not None:
        out = out / avg_factor
    return out


if __name__ == "__main__":
    key = jax.random.PRNGKey(0)
    k1, k2 = jax.random.split(key)
    # NCHW-shaped logits / soft IoU targets, like dense detection quality scores.
    preds = jax.random.normal(k1, (2, 4, 16, 16), dtype=jnp.float32)
    targets = jax.random.uniform(k2, (2, 4, 16, 16), dtype=jnp.float32)
    avg_factor = jnp.float32(8.0)

    out = qfl_loss(preds, targets, avg_factor)
    jax.block_until_ready(out)

    ref = _qfl_loss_ref(preds, targets, avg_factor)
    assert jnp.allclose(out, ref, rtol=1e-5, atol=1e-4), (out, ref)

    print("KERNEL_OK")
</pallas_src>

<mosaic_0001>
module attributes {stable_mosaic.version = 11 : i64} {
  func.func @kernel(%arg0: i32, %arg1: i32, %arg2: memref<8x128xf32, #tpu.memory_space<vmem>>, %arg3: memref<8x128xf32, #tpu.memory_space<vmem>>, %arg4: memref<8x128xf32, #tpu.memory_space<vmem>>) attributes {dimension_semantics = [#tpu.dimension_semantics<parallel>, #tpu.dimension_semantics<arbitrary>], iteration_bounds = array<i64: 2, 1>, scalar_prefetch = 0 : i64, scratch_operands = 0 : i64, tpu.core_type = #tpu.core_type<tc>, window_params = [{transform_indices = @transform_0, window_bounds = array<i64: 8, 128>}, {transform_indices = @transform_1, window_bounds = array<i64: 8, 128>}, {transform_indices = @transform_2, window_bounds = array<i64: 8, 128>}]} {
    %c0 = arith.constant 0 : index
    %c0_0 = arith.constant 0 : index
    %0 = vector.load %arg2[%c0, %c0_0] : memref<8x128xf32, #tpu.memory_space<vmem>>, vector<8x128xf32>
    %c0_1 = arith.constant 0 : index
    %c0_2 = arith.constant 0 : index
    %1 = vector.load %arg3[%c0_1, %c0_2] : memref<8x128xf32, #tpu.memory_space<vmem>>, vector<8x128xf32>
    %2 = math.absf %0 : vector<8x128xf32>
    %cst = arith.constant 0.000000e+00 : f32
    %3 = vector.broadcast %cst : f32 to vector<8x128xf32>
    %4 = arith.subf %3, %2 : vector<8x128xf32>
    %5 = math.exp %4 : vector<8x128xf32>
    %cst_3 = arith.constant 0.000000e+00 : f32
    %6 = vector.broadcast %cst_3 : f32 to vector<8x128xf32>
    %7 = arith.maximumf %0, %6 : vector<8x128xf32>
    %8 = arith.mulf %0, %1 : vector<8x128xf32>
    %9 = arith.subf %7, %8 : vector<8x128xf32>
    %10 = math.log1p %5 : vector<8x128xf32>
    %11 = arith.addf %9, %10 : vector<8x128xf32>
    %cst_4 = arith.constant 0.000000e+00 : f32
    %12 = vector.broadcast %cst_4 : f32 to vector<8x128xf32>
    %13 = arith.cmpf oge, %0, %12 : vector<8x128xf32>
    %cst_5 = arith.constant 1.000000e+00 : f32
    %14 = vector.broadcast %cst_5 : f32 to vector<8x128xf32>
    %15 = arith.select %13, %14, %5 : vector<8x128xi1>, vector<8x128xf32>
    %cst_6 = arith.constant 1.000000e+00 : f32
    %16 = vector.broadcast %cst_6 : f32 to vector<8x128xf32>
    %17 = arith.addf %16, %5 : vector<8x128xf32>
    %18 = arith.divf %15, %17 : vector<8x128xf32>
    %19 = arith.subf %18, %1 : vector<8x128xf32>
    %20 = arith.mulf %19, %19 : vector<8x128xf32>
    %21 = arith.mulf %11, %20 : vector<8x128xf32>
    %c0_i32 = arith.constant 0 : i32
    %22 = arith.cmpi eq, %arg1, %c0_i32 : i32
    %23 = arith.extui %22 : i1 to i32
    %c0_i32_7 = arith.constant 0 : i32
    %24 = arith.cmpi ne, %23, %c0_i32_7 : i32
    scf.if %24 {
      %c0_10 = arith.constant 0 : index
      %c0_11 = arith.constant 0 : index
      %28 = vector.load %arg4[%c0_10, %c0_11] : memref<8x128xf32, #tpu.memory_space<vmem>>, vector<8x128xf32>
      tpu.vector_store %arg4[%c0_10, %c0_11], %21 {strides = array<i32>} : memref<8x128xf32, #tpu.memory_space<vmem>>, vector<8x128xf32>,
    } else {
    }
    %c0_i32_8 = arith.constant 0 : i32
    %25 = arith.cmpi ne, %arg1, %c0_i32_8 : i32
    %26 = arith.extui %25 : i1 to i32
    %c0_i32_9 = arith.constant 0 : i32
    %27 = arith.cmpi ne, %26, %c0_i32_9 : i32
    scf.if %27 {
      %c0_10 = arith.constant 0 : index
      %c0_11 = arith.constant 0 : index
      %28 = vector.load %arg4[%c0_10, %c0_11] : memref<8x128xf32, #tpu.memory_space<vmem>>, vector<8x128xf32>
      %29 = arith.addf %28, %21 : vector<8x128xf32>
      %c0_12 = arith.constant 0 : index
      %c0_13 = arith.constant 0 : index
      %30 = vector.load %arg4[%c0_12, %c0_13] : memref<8x128xf32, #tpu.memory_space<vmem>>, vector<8x128xf32>
      tpu.vector_store %arg4[%c0_12, %c0_13], %29 {strides = array<i32>} : memref<8x128xf32, #tpu.memory_space<vmem>>, vector<8x128xf32>,
    } else {
    }
    return
  }
  func.func @transform_0(%arg0: i32, %arg1: i32) -> (i32, i32) {
    %c1_i32 = arith.constant 1 : i32
    %0 = arith.muli %arg0, %c1_i32 : i32
    %1 = arith.addi %0, %arg1 : i32
    %c0_i32 = arith.constant 0 : i32
    %c0_i32_0 = arith.constant 0 : i32
    return %1, %c0_i32 : i32, i32
  }
  func.func @transform_1(%arg0: i32, %arg1: i32) -> (i32, i32) {
    %c1_i32 = arith.constant 1 : i32
    %0 = arith.muli %arg0, %c1_i32 : i32
    %1 = arith.addi %0, %arg1 : i32
    %c0_i32 = arith.constant 0 : i32
    %c0_i32_0 = arith.constant 0 : i32
    return %1, %c0_i32 : i32, i32
  }
  func.func @transform_2(%arg0: i32, %arg1: i32) -> (i32, i32) {
    %c0_i32 = arith.constant 0 : i32
    %c0_i32_0 = arith.constant 0 : i32
    return %arg0, %c0_i32 : i32, i32
  }
}

</mosaic_0001>

<llo_original>
// kernel: tpu_custom_call.1
$region0: #{tpu_custom_call.1}
  #allocation0 [shape = 'u32[]', space=smem, size = 0x4, offset = 0x4, fixed_abs, tag = 'smem constant byte address 0x4 - core index']
  #allocation1 [shape = 'u32[144,128]{1,0:T(1,128)}', space=vmem, size = 0x12000, scoped, tag = 'internal scratch']
  %s0 = inlined_call_operand.hbm [shape: f32[16,128], index: 0, kind: input, shape index: {}]
  %s1 = inlined_call_operand.hbm [shape: f32[16,128], index: 1, kind: input, shape index: {}]
  %s2 = inlined_call_operand.hbm [shape: f32[16,128], index: 2, kind: output, shape index: {}]
  %s3 = sld [smem:[#allocation0]]
  $region57: #{tpu_custom_call.1} parent=0
    _
  %s5 = ssub.s32 1, %s3
  %s6 = scalar_select 0, %s5, %s3
  $region1: #{tpu_custom_call.1} parent=0
    #allocation2 [shape = 'u8[8192]{0}', space=vmem, size = 0x2000, scoped, tag = 'input window, operand 0']
    #allocation3 [shape = 's32[2]{0}', space=sflag, size = 0x8, scoped, tag = 'scoped memory for tpu_custom_call.1']
    #allocation4 [shape = 's32[2]{0}', space=sflag, size = 0x8, scoped, tag = 'scoped memory for tpu_custom_call.1']
    #allocation5 [shape = 'u8[8192]{0}', space=vmem, size = 0x2000, scoped, tag = 'input window, operand 1']
    #allocation6 [shape = 's32[2]{0}', space=sflag, size = 0x8, scoped, tag = 'scoped memory for tpu_custom_call.1']
    #allocation7 [shape = 'u8[8192]{0}', space=vmem, size = 0x2000, scoped, tag = 'output window, operand 0']
    %7 = vsyncpa [#allocation3], 0
    %s8 = scalar_lea.sflag [#allocation3], 1
    %9 = vsyncpa %s8, 0
    %10 = vsyncpa [#allocation6], 0
    %s11 = scalar_lea.sflag [#allocation6], 1
    %12 = vsyncpa %s11, 0
    %13 = vsyncpa [#allocation4], 0
    %s14 = scalar_lea.sflag [#allocation4], 1
    %15 = vsyncpa %s14, 0
    loop: start=0, step=1, limit=4
    $region2: #{tpu_custom_call.1} parent=1 // loop_pre_header
      _
    $region3: #{tpu_custom_call.1} parent=1 // loop_header
      %s17 = sphi 0, %s21
      %p18 = scmp.ge.s32.totalorder %s17, 4
      %s24 = sphi 0, %s36
      %s25 = sphi 0, %s32
      %s26 = sphi 0, %s24
      %s27 = sphi 0, %s25
      %s28 = sphi 0, %s26
      %s29 = sphi 0, %s27
      %s41 = sphi 0, %s43
      %s44 = sphi 0, %s41
      %s45 = sphi 0, %s44
      %s61 = sphi 0, %s45
      %s69 = sphi 0, %s71
      %s72 = sphi 0, %s69
      %s73 = sphi 0, %s72
      %s89 = sphi 0, %s73
      %s95 = sphi 0, %s97
      %s98 = sphi 0, %s95
      %s99 = sphi 0, %s98
      %s115 = sphi 0, %s99
    $region4: #{tpu_custom_call.1} parent=1 // loop_header_branch
      %20 = sbr.rel (%p18) target = $region8
    $region5: #{tpu_custom_call.1} parent=1 // loop_body
      %s22 = ssub.s32 %s17, 1
      %s23 = ssub.s32 %s17, 2
      %s30 = sadd.s32 1, %s25
      %p31 = scmp.ge.s32.totalorder %s30, 1
      %s32 = scalar_select %p31, 0, %s30
      %s33 = sadd.s32 1, %s24
      %s34 = scalar_select %p31, %s33, %s24
      %p35 = scmp.ge.s32.totalorder %s34, 2
      %s36 = scalar_select %p35, 0, %s34
      %s37 = sadd.s32 %s24, %s25
      %s38 = sadd.s32 %s36, %s32
      %s39 = ssub.s32 %s37, %s38
      %p40 = scmp.eq.s32.totalorder %s39, 0
      %s42 = sadd.s32 %s41, 1
      %s43 = scalar_select %p40, %s41, %s42
      %p46 = pneg %p40
      %p47 = scmp.eq.s32.totalorder %s17, 1
      %p48 = por %p46, %p47
      %p49 = scmp.ne.s32.totalorder %s41, %s44
      %p50 = scmp.eq.s32.totalorder %s17, 0
      %p51 = por %p49, %p50
      %p52 = scmp.ne.s32.totalorder %s41, %s44
      %p53 = scmp.eq.s32.totalorder %s22, 1
      %p54 = por %p52, %p53
      %p55 = scmp.ne.s32.totalorder %s44, %s45
      %p56 = scmp.eq.s32.totalorder %s22, 0
      %p57 = por %p55, %p56
      %p58 = scmp.ne.s32.totalorder %s44, %s45
      %p59 = scmp.eq.s32.totalorder %s23, 1
      %p60 = por %p58, %p59
      %p62 = scmp.ne.s32.totalorder %s45, %s61
      %p63 = scmp.eq.s32.totalorder %s23, 0
      %p64 = por %p62, %p63
      %s65 = sadd.s32 %s24, %s25
      %s66 = sadd.s32 %s36, %s32
      %s67 = ssub.s32 %s65, %s66
      %p68 = scmp.eq.s32.totalorder %s67, 0
      %s70 = sadd.s32 %s69, 1
      %s71 = scalar_select %p68, %s69, %s70
      %p74 = pneg %p68
      %p75 = scmp.eq.s32.totalorder %s17, 1
      %p76 = por %p74, %p75
      %p77 = scmp.ne.s32.totalorder %s69, %s72
      %p78 = scmp.eq.s32.totalorder %s17, 0
      %p79 = por %p77, %p78
      %p80 = scmp.ne.s32.totalorder %s69, %s72
      %p81 = scmp.eq.s32.totalorder %s22, 1
      %p82 = por %p80, %p81
      %p83 = scmp.ne.s32.totalorder %s72, %s73
      %p84 = scmp.eq.s32.totalorder %s22, 0
      %p85 = por %p83, %p84
      %p86 = scmp.ne.s32.totalorder %s72, %s73
      %p87 = scmp.eq.s32.totalorder %s23, 1
      %p88 = por %p86, %p87
      %p90 = scmp.ne.s32.totalorder %s73, %s89
      %p91 = scmp.eq.s32.totalorder %s23, 0
      %p92 = por %p90, %p91
      %s93 = ssub.s32 %s24, %s36
      %p94 = scmp.eq.s32.totalorder %s93, 0
      %s96 = sadd.s32 %s95, 1
      %s97 = scalar_select %p94, %s95, %s96
      %p100 = pneg %p94
      %p101 = scmp.eq.s32.totalorder %s17, 1
      %p102 = por %p100, %p101
      %p103 = scmp.ne.s32.totalorder %s95, %s98
      %p104 = scmp.eq.s32.totalorder %s17, 0
      %p105 = por %p103, %p104
      %p106 = scmp.ne.s32.totalorder %s95, %s98
      %p107 = scmp.eq.s32.totalorder %s22, 1
      %p108 = por %p106, %p107
      %p109 = scmp.ne.s32.totalorder %s98, %s99
      %p110 = scmp.eq.s32.totalorder %s22, 0
      %p111 = por %p109, %p110
      %p112 = scmp.ne.s32.totalorder %s98, %s99
      %p113 = scmp.eq.s32.totalorder %s23, 1
      %p114 = por %p112, %p113
      %p116 = scmp.ne.s32.totalorder %s99, %s115
      %p117 = scmp.eq.s32.totalorder %s23, 0
      %p118 = por %p116, %p117
      %p119 = scmp.le.s32.totalorder 1, %s17
      %p120 = scmp.lt.s32.totalorder %s17, 3
      %p121 = pnand %p119, %p120
      %p122 = pneg %p121
      // Predicated region
      $region9: #{tpu_custom_call.1} parent=5 // pred_check
        _
      $region10: #{tpu_custom_call.1} parent=5 // pred_check_branch
        %124 = sbr.rel (%p121) target = $region12
      $region11: #{tpu_custom_call.1} parent=5 // pred_region
        %s125 = ssub.s32 %s17, 1
      $region12: #{tpu_custom_call.1} parent=5 // pred_fallthru
        _
      %p126 = scmp.lt.s32.totalorder %s17, 2
      // Predicated region
      $region13: #{tpu_custom_call.1} parent=5 // pred_check
        %p127 = pneg %p126
      $region14: #{tpu_custom_call.1} parent=5 // pred_check_branch
        %129 = sbr.rel (%p127) target = $region16
      $region15: #{tpu_custom_call.1} parent=5 // pred_region
        // Predicated region
        $region17: #{tpu_custom_call.1} parent=15 // pred_check
          %p130 = pneg %p51
        $region18: #{tpu_custom_call.1} parent=15 // pred_check_branch
          %132 = sbr.rel (%p130) target = $region20
        $region19: #{tpu_custom_call.1} parent=15 // pred_region
          %s133 = sand.u32 %s41, 1
          %s134 = scalar_lea.sflag [#allocation3], %s133
          %s135 = sand.u32 %s41, 1
          %s136 = smul.addr %s135, 8
          %s137 = scalar_lea.vmem [#allocation2], %s136
          %s138 = sadd.s32 %s24, %s25
          %s140 = ssub.s32 128, 128
          %141 = vsyncadd %s134, %s140
          %s142 = smul.addr %s138, 128
          %s143 = scalar_lea.hbm %s0, %s142
          %s145 = sshll.u32 %s137, 4
          %s146 = int_to_ptr.vmem [resolvable:$true] %s145
          %148 = dma.hbm_to_vmem [thread:$0]  %s143, 128, %s146, %s134
        $region20: #{tpu_custom_call.1} parent=15 // pred_fallthru
          _
        // Predicated region
        $region21: #{tpu_custom_call.1} parent=15 // pred_check
          %p149 = pneg %p79
        $region22: #{tpu_custom_call.1} parent=15 // pred_check_branch
          %151 = sbr.rel (%p149) target = $region24
        $region23: #{tpu_custom_call.1} parent=15 // pred_region
          %s152 = sand.u32 %s69, 1
          %s153 = scalar_lea.sflag [#allocation6], %s152
          %s154 = sand.u32 %s69, 1
          %s155 = smul.addr %s154, 8
          %s156 = scalar_lea.vmem [#allocation5], %s155
          %s157 = sadd.s32 %s24, %s25
          %s159 = ssub.s32 128, 128
          %160 = vsyncadd %s153, %s159
          %s161 = smul.addr %s157, 128
          %s162 = scalar_lea.hbm %s1, %s161
          %s164 = sshll.u32 %s156, 4
          %s165 = int_to_ptr.vmem [resolvable:$true] %s164
          %167 = dma.hbm_to_vmem [thread:$0]  %s162, 128, %s165, %s153
        $region24: #{tpu_custom_call.1} parent=15 // pred_fallthru
          _
      $region16: #{tpu_custom_call.1} parent=5 // pred_fallthru
        _
      %p168 = scmp.le.s32.totalorder 1, %s17
      %p169 = scmp.lt.s32.totalorder %s17, 3
      %p170 = pnand %p168, %p169
      %p171 = pneg %p170
      // Predicated region
      $region25: #{tpu_custom_call.1} parent=5 // pred_check
        _
      $region26: #{tpu_custom_call.1} parent=5 // pred_check_branch
        %173 = sbr.rel (%p170) target = $region28
      $region27: #{tpu_custom_call.1} parent=5 // pred_region
        %s174 = ssub.s32 %s17, 1
        %s175 = sand.u32 %s44, 1
        %s176 = scalar_lea.sflag [#allocation3], %s175
        %s177 = sand.u32 %s44, 1
        %s178 = smul.addr %s177, 8
        %s179 = scalar_lea.vmem [#allocation2], %s178
        // Predicated region
        $region29: #{tpu_custom_call.1} parent=27 // pred_check
          %p180 = pneg %p57
        $region30: #{tpu_custom_call.1} parent=27 // pred_check_branch
          %182 = sbr.rel (%p180) target = $region32
        $region31: #{tpu_custom_call.1} parent=27 // pred_region
          %183 = dma.done %s176, 128
        $region32: #{tpu_custom_call.1} parent=27 // pred_fallthru
          _
        %s184 = sand.u32 %s72, 1
        %s185 = scalar_lea.sflag [#allocation6], %s184
        %s186 = sand.u32 %s72, 1
        %s187 = smul.addr %s186, 8
        %s188 = scalar_lea.vmem [#allocation5], %s187
        // Predicated region
        $region33: #{tpu_custom_call.1} parent=27 // pred_check
          %p189 = pneg %p85
        $region34: #{tpu_custom_call.1} parent=27 // pred_check_branch
          %191 = sbr.rel (%p189) target = $region36
        $region35: #{tpu_custom_call.1} parent=27 // pred_region
          %192 = dma.done %s185, 128
        $region36: #{tpu_custom_call.1} parent=27 // pred_fallthru
          _
        %s193 = sand.u32 %s44, 1
        %s194 = scalar_lea.sflag [#allocation3], %s193
        %s195 = sand.u32 %s44, 1
        %s196 = smul.addr %s195, 8
        %s197 = scalar_lea.vmem [#allocation2], %s196
        %p198 = pneg %p57
        %p199 = pneg %p54
        %s200 = sand.u32 %s72, 1
        %s201 = scalar_lea.sflag [#allocation6], %s200
        %s202 = sand.u32 %s72, 1
        %s203 = smul.addr %s202, 8
        %s204 = scalar_lea.vmem [#allocation5], %s203
        %p205 = pneg %p85
        %p206 = pneg %p82
        %p207 = pneg %p111
        %p208 = pneg %p108
        %s209 = sand.u32 %s98, 1
        %s210 = scalar_lea.sflag [#allocation4], %s209
        %s211 = sand.u32 %s98, 1
        %s212 = smul.addr %s211, 8
        %s213 = scalar_lea.vmem [#allocation7], %s212
        %s214 = sadd.s32 %s26, %s27
        %s215 = sadd.s32 %s26, %s27
        %v216 = vld [vmem:[%s179] sm:$0xff]
        %v217 = vld [vmem:[%s188] sm:$0xff]
        %v218 = vand.u32 2147483647, %v216
        %v219 = vsub.f32 0.0, %v218
        %v220 = vmul.f32 %v219, 1.442695
        %v221 = vpow.pop %v220
        %v222 = vmax.f32 %v216, 0.0
        %v223 = vmul.f32 %v216, %v217
        %v224 = vsub.f32 %v222, %v223
        %v225 = vadd.f32 %v221, 1.0
        %v226 = vlog2.pop %v225
        %v227 = vmul.f32 %v226, 0.6931472
        %v228 = vmul.f32 -0.5, %v221
        %v229 = vadd.f32 %v228, 1.0
        %v230 = vmul.f32 %v229, %v221
        %v231 = vand.u32 2147483647, %v221
        %vm232 = vcmp.lt.f32.partialorder %v231, 0.0004427343
        %v233 = vsel %vm232, %v230, %v227
        %v234 = vadd.f32 %v224, %v233
        %vm235 = vcmp.ge.f32.partialorder %v216, 0.0
        %v236 = vsel %vm235, 1.0, %v221
        %v237 = vadd.f32 %v221, 1.0
        %v238 = vrcp.pop %v237
        %v239 = vmul.f32 %v236, %v238
        %v240 = vsub.f32 %v239, %v217
        %v241 = vmul.f32 %v240, %v240
        %v242 = vmul.f32 %v234, %v241
        %p243 = scmp.eq.s32.totalorder %s27, 0
        // Predicated region
        $region37: #{tpu_custom_call.1} parent=27 // pred_check
          %p244 = pneg %p243
        $region38: #{tpu_custom_call.1} parent=27 // pred_check_branch
          %246 = sbr.rel (%p244) target = $region40
        $region39: #{tpu_custom_call.1} parent=27 // pred_region
          %247 = vst [vmem:[%s213] sm:$0xff] %v242
        $region40: #{tpu_custom_call.1} parent=27 // pred_fallthru
          _
        %p248 = scmp.ne.s32.totalorder %s27, 0
        // Predicated region
        $region41: #{tpu_custom_call.1} parent=27 // pred_check
          %p249 = pneg %p248
        $region42: #{tpu_custom_call.1} parent=27 // pred_check_branch
          %251 = sbr.rel (%p249) target = $region44
        $region43: #{tpu_custom_call.1} parent=27 // pred_region
          %v252 = vld [vmem:[%s213] sm:$0xff]
          %v253 = vadd.f32 %v252, %v242
          %254 = vst [vmem:[%s213] sm:$0xff] %v253
        $region44: #{tpu_custom_call.1} parent=27 // pred_fallthru
          _
        %s255 = sand.u32 %s98, 1
        %s256 = scalar_lea.sflag [#allocation4], %s255
        %s257 = sand.u32 %s98, 1
        %s258 = smul.addr %s257, 8
        %s259 = scalar_lea.vmem [#allocation7], %s258
        // Predicated region
        $region45: #{tpu_custom_call.1} parent=27 // pred_check
          %p260 = pneg %p108
        $region46: #{tpu_custom_call.1} parent=27 // pred_check_branch
          %262 = sbr.rel (%p260) target = $region48
        $region47: #{tpu_custom_call.1} parent=27 // pred_region
          %s264 = ssub.s32 128, 128
          %265 = vsyncadd %s256, %s264
          %s266 = smul.addr %s26, 128
          %s267 = scalar_lea.hbm %s2, %s266
          %s269 = sshll.u32 %s259, 4
          %s270 = int_to_ptr.vmem [resolvable:$true] %s269
          %272 = dma.vmem_to_hbm [thread:$0]  %s270, 128, %s267, %s256
        $region48: #{tpu_custom_call.1} parent=27 // pred_fallthru
          _
      $region28: #{tpu_custom_call.1} parent=5 // pred_fallthru
        _
      %p273 = scmp.le.s32.totalorder 2, %s17
      // Predicated region
      $region49: #{tpu_custom_call.1} parent=5 // pred_check
        %p274 = pneg %p273
      $region50: #{tpu_custom_call.1} parent=5 // pred_check_branch
        %276 = sbr.rel (%p274) target = $region52
      $region51: #{tpu_custom_call.1} parent=5 // pred_region
        %s277 = ssub.s32 %s17, 2
        // Predicated region
        $region53: #{tpu_custom_call.1} parent=51 // pred_check
          %p278 = pneg %p114
        $region54: #{tpu_custom_call.1} parent=51 // pred_check_branch
          %280 = sbr.rel (%p278) target = $region56
        $region55: #{tpu_custom_call.1} parent=51 // pred_region
          %s281 = sand.u32 %s99, 1
          %s282 = scalar_lea.sflag [#allocation4], %s281
          %s283 = sand.u32 %s99, 1
          %s284 = smul.addr %s283, 8
          %s285 = scalar_lea.vmem [#allocation7], %s284
          %286 = dma.done %s282, 128
        $region56: #{tpu_custom_call.1} parent=51 // pred_fallthru
          _
      $region52: #{tpu_custom_call.1} parent=5 // pred_fallthru
        _
    $region6: #{tpu_custom_call.1} parent=1 // loop_footer
      %s21 = sadd.s32 1, %s17
    $region7: #{tpu_custom_call.1} parent=1 // loop_footer_branch
      %16 = sbr.rel target = $region3
    $region8: #{tpu_custom_call.1} parent=1 // loop_exit
      _
    %287 = vsyncpa [#allocation3], 1
    %s288 = scalar_lea.sflag [#allocation3], 1
    %289 = vsyncpa %s288, 1
    %290 = vsyncpa [#allocation6], 1
    %s291 = scalar_lea.sflag [#allocation6], 1
    %292 = vsyncpa %s291, 1
    %293 = vsyncpa [#allocation4], 1
    %s294 = scalar_lea.sflag [#allocation4], 1
    %295 = vsyncpa %s294, 1

</llo_original>
